<compile_context>
chip_gen: v7x
topology: tpu7x:2x2x1
jax: 0.10.0
libtpu: 0.0.40
codegen_flags: <defaults>
</compile_context>

<pallas_src>
import jax
import jax.numpy as jnp
from jax.experimental import pallas as pl
from jax.experimental.pallas import tpu as pltpu


def _round_up(x, m):
    return (x + m - 1) // m * m


def _head_kernel(x_ref, w1_ref, b1_ref, w2_ref, b2_ref, o_ref, acc_ref):
    # x_ref:  [TM, H]  (compute_dtype)     w1_ref: [H, TN] (compute_dtype)
    # b1_ref: [1, TN]  (f32)               w2_ref: [TN, L] (compute_dtype)
    # b2_ref: [1, L]   (f32)               o_ref:  [TM, L] (f32)
    # acc_ref:[TM, L]  (f32 scratch, persists across the N/"arbitrary" axis)
    j = pl.program_id(1)

    @pl.when(j == 0)
    def _():
        acc_ref[...] = jnp.zeros_like(acc_ref)

    # dropout (eval mode) -> identity
    h = jnp.dot(x_ref[...], w1_ref[...], preferred_element_type=jnp.float32)
    h = jnp.tanh(h + b1_ref[...])
    # dropout (eval mode) -> identity
    # Feed the second (tiny, L-column) GEMM in compute_dtype; keep f32 accumulation.
    acc_ref[...] += jnp.dot(h.astype(w2_ref.dtype), w2_ref[...],
                            preferred_element_type=jnp.float32)

    @pl.when(j == pl.num_programs(1) - 1)
    def _():
        o_ref[...] = (acc_ref[...] + b2_ref[...]).astype(o_ref.dtype)


def model_head_forward(features, w1, b1, w2, b2, *, tile_m=512, tile_n=None,
                       compute_dtype=None):
    """features: [B, S, H]; w1: [H, H], b1: [H], w2: [H, L], b2: [L] ([in, out]).

    Returns [B, S, L] float32 = tanh(features @ w1 + b1) @ w2 + b2
    (dropout is identity in inference mode).
    """
    B, S, H = features.shape
    L = w2.shape[1]
    M = B * S

    in_dtype = features.dtype
    if compute_dtype is None:
        compute_dtype = in_dtype  # f32 in -> f32 MXU feed (matches torch numerics)
    compute_dtype = jnp.dtype(compute_dtype)
    itemsize = compute_dtype.itemsize

    x2d = features.reshape(M, H)
    casting = x2d.dtype != compute_dtype
    if casting:
        x2d = x2d.astype(compute_dtype)  # fused into the operand (allow_input_fusion)
    w1c = w1.astype(compute_dtype)
    w2c = w2.astype(compute_dtype)
    b1_2d = b1.reshape(1, H).astype(jnp.float32)
    b2_2d = b2.reshape(1, L).astype(jnp.float32)

    # ---- tile selection & explicit VMEM budgeting --------------------------
    try:
        vmem_cap = int(getattr(pltpu.get_tpu_info(), "vmem_capacity_bytes",
                               64 * 1024 * 1024))
    except Exception:
        vmem_cap = 64 * 1024 * 1024            # conservative (v7x per-core VMEM)
    budget = min((3 * vmem_cap) // 4, 96 * 1024 * 1024)  # 48 MiB v7x / 96 MiB v5e,v6e

    sub = 16 if itemsize < 4 else 8            # sublane multiple for compute_dtype
    TM = max(sub, min(_round_up(tile_m, sub), _round_up(M, sub)))

    def vmem_need(tm, tn):
        lane = 128
        x_b = 2 * tm * H * itemsize                    # double-buffered x tiles
        w1_b = 2 * H * tn * itemsize                   # double-buffered w1 tiles
        b1_b = 2 * 8 * _round_up(tn, lane) * 4         # sublane/lane-padded bias
        w2_b = 2 * _round_up(tn, 8) * lane * itemsize  # lane-padded w2 tiles
        b2_b = 2 * 8 * lane * 4
        out_b = 2 * tm * lane * 4                      # (TM, L) lane-padded to 128
        acc_b = tm * lane * 4                          # scratch accumulator
        h_b = tm * tn * 4                              # f32 h intermediate
        total = x_b + w1_b + b1_b + w2_b + b2_b + out_b + acc_b + h_b
        return (5 * total) // 4                        # ~25% headroom

    if tile_n is not None and tile_n != H:
        if H % tile_n != 0 or tile_n % 128 != 0:
            raise ValueError("tile_n must divide H and be a multiple of 128")
        TN = tile_n
    else:
        TN = H
        if vmem_need(TM, TN) > budget:
            # w1 does not fit VMEM-resident (large H, esp. v7x): tile its N dim.
            for cand in (2048, 1024, 512, 256, 128):
                if cand < H and H % cand == 0:
                    TN = cand
                    if vmem_need(TM, TN) <= budget:
                        break
    while vmem_need(TM, TN) > budget and TM > sub:
        TM = max(sub, _round_up(TM // 2, sub))

    grid_m = pl.cdiv(M, TM)
    n_steps = H // TN
    grid = (grid_m, n_steps)

    vmem_limit = int(max(16 * 1024 * 1024, min(vmem_need(TM, TN), budget)))

    cost = pl.CostEstimate(
        flops=2 * M * H * (H + L),
        transcendentals=M * H,
        bytes_accessed=int(M * H * itemsize
                           + (grid_m if n_steps > 1 else 1) * H * H * itemsize
                           + H * L * itemsize + (H + L) * 4 + M * L * 4),
    )

    out = pl.pallas_call(
        _head_kernel,
        out_shape=jax.ShapeDtypeStruct((M, L), jnp.float32),
        grid_spec=pltpu.PrefetchScalarGridSpec(
            num_scalar_prefetch=0,
            grid=grid,
            in_specs=[
                pl.BlockSpec((TM, H), lambda i, j: (i, 0)),  # x: tiled over M, reused over j
                pl.BlockSpec((H, TN), lambda i, j: (0, j)),  # w1: VMEM-resident / N-tiled
                pl.BlockSpec((1, TN), lambda i, j: (0, j)),  # b1
                pl.BlockSpec((TN, L), lambda i, j: (j, 0)),  # w2
                pl.BlockSpec((1, L), lambda i, j: (0, 0)),   # b2
            ],
            out_specs=pl.BlockSpec((TM, L), lambda i, j: (i, 0)),
            scratch_shapes=[pltpu.VMEM((TM, L), jnp.float32)],
        ),
        compiler_params=pltpu.CompilerParams(
            dimension_semantics=("parallel", "arbitrary"),
            vmem_limit_bytes=vmem_limit,
            allow_input_fusion=[True, True, True, True, True] if casting else None,
        ),
        cost_estimate=cost,
    )(x2d, w1c, b1_2d, w2c, b2_2d)

    return out.reshape(B, S, L)


def _reference(features, w1, b1, w2, b2):
    h = jnp.tanh(features @ w1 + b1)
    return h @ w2 + b2


if __name__ == "__main__":
    # Small config consistent with the module: batch=2, seq=8, hidden=32, labels=4
    B, S, H, L = 2, 8, 32, 4
    key = jax.random.PRNGKey(0)
    k_x, k_w1, k_b1, k_w2, k_b2 = jax.random.split(key, 5)

    features = jax.random.normal(k_x, (B, S, H), dtype=jnp.float32)
    bound1 = 1.0 / (H ** 0.5)
    w1 = jax.random.uniform(k_w1, (H, H), jnp.float32, -bound1, bound1)   # [in, out]
    b1 = jax.random.uniform(k_b1, (H,), jnp.float32, -bound1, bound1)
    w2 = jax.random.uniform(k_w2, (H, L), jnp.float32, -bound1, bound1)   # [in, out]
    b2 = jax.random.uniform(k_b2, (L,), jnp.float32, -bound1, bound1)

    ref = _reference(features, w1, b1, w2, b2)

    # 1) default f32 path, single tile, no padding anywhere.
    out = jax.block_until_ready(model_head_forward(features, w1, b1, w2, b2))
    assert out.shape == (B, S, L)
    assert jnp.allclose(out, ref, atol=1e-5, rtol=1e-5), "f32 mismatch vs reference"

    # 2) multi-tile ragged path: M=150 is not a multiple of the tile (64); the
    #    last block is partially out-of-bounds (garbage rows read, writes masked).
    B2, S2 = 3, 50
    features2 = jax.random.normal(jax.random.PRNGKey(1), (B2, S2, H), jnp.float32)
    ref2 = _reference(features2, w1, b1, w2, b2)
    out2 = jax.block_until_ready(
        model_head_forward(features2, w1, b1, w2, b2, tile_m=64))
    assert out2.shape == (B2, S2, L)
    assert jnp.allclose(out2, ref2, atol=1e-5, rtol=1e-5), "tiled mismatch vs reference"

    # 3) bf16-fed MXU path (v5e/v6e/v7x perf mode), f32 accumulation everywhere.
    out_bf16 = jax.block_until_ready(
        model_head_forward(features, w1, b1, w2, b2, compute_dtype=jnp.bfloat16))
    assert out_bf16.shape == (B, S, L)
    assert jnp.allclose(out_bf16, ref, atol=5e-2, rtol=5e-2), "bf16 mismatch vs reference"

    # 4) N-tiled (w1 column-tiled) accumulator path, as used for large H on v7x:
    #    H=256 tiled as 2 x 128, ragged M (80 rows with 64-row tiles).
    H4 = 256
    kk = jax.random.split(jax.random.PRNGKey(2), 5)
    feats4 = jax.random.normal(kk[0], (2, 40, H4), jnp.float32)
    bound4 = 1.0 / (H4 ** 0.5)
    w1_4 = jax.random.uniform(kk[1], (H4, H4), jnp.float32, -bound4, bound4)
    b1_4 = jax.random.uniform(kk[2], (H4,), jnp.float32, -bound4, bound4)
    w2_4 = jax.random.uniform(kk[3], (H4, L), jnp.float32, -bound4, bound4)
    b2_4 = jax.random.uniform(kk[4], (L,), jnp.float32, -bound4, bound4)
    ref4 = _reference(feats4, w1_4, b1_4, w2_4, b2_4)
    out4 = jax.block_until_ready(
        model_head_forward(feats4, w1_4, b1_4, w2_4, b2_4, tile_m=64, tile_n=128))
    assert out4.shape == (2, 40, L)
    assert jnp.allclose(out4, ref4, atol=1e-4, rtol=1e-4), "N-tiled mismatch vs reference"

    print("KERNEL_OK")
</pallas_src>

<mosaic_0001>
module attributes {stable_mosaic.version = 11 : i64} {
  func.func @_head_kernel(%arg0: i32, %arg1: i32, %arg2: memref<16x32xf32, #tpu.memory_space<vmem>>, %arg3: memref<32x32xf32, #tpu.memory_space<vmem>>, %arg4: memref<1x32xf32, #tpu.memory_space<vmem>>, %arg5: memref<32x4xf32, #tpu.memory_space<vmem>>, %arg6: memref<1x4xf32, #tpu.memory_space<vmem>>, %arg7: memref<16x4xf32, #tpu.memory_space<vmem>>, %arg8: memref<16x4xf32, #tpu.memory_space<vmem>>) attributes {dimension_semantics = [#tpu.dimension_semantics<parallel>, #tpu.dimension_semantics<arbitrary>], iteration_bounds = array<i64: 1, 1>, scalar_prefetch = 0 : i64, scratch_operands = 1 : i64, tpu.core_type = #tpu.core_type<tc>, window_params = [{transform_indices = @transform_0, window_bounds = array<i64: 16, 32>}, {transform_indices = @transform_1, window_bounds = array<i64: 32, 32>}, {transform_indices = @transform_2, window_bounds = array<i64: 1, 32>}, {transform_indices = @transform_3, window_bounds = array<i64: 32, 4>}, {pipeline_mode = #tpu.pipeline_mode<synchronous>, transform_indices = @transform_4, window_bounds = array<i64: 1, 4>}, {transform_indices = @transform_5, window_bounds = array<i64: 16, 4>}]} {
    %c0_i32 = arith.constant 0 : i32
    %0 = arith.cmpi eq, %arg1, %c0_i32 : i32
    %1 = arith.extui %0 : i1 to i32
    %c0_i32_0 = arith.constant 0 : i32
    %2 = arith.cmpi ne, %1, %c0_i32_0 : i32
    scf.if %2 {
      %cst_15 = arith.constant 0.000000e+00 : f32
      %18 = vector.broadcast %cst_15 : f32 to vector<16x4xf32>
      %c0_16 = arith.constant 0 : index
      %c0_17 = arith.constant 0 : index
      %19 = vector.load %arg8[%c0_16, %c0_17] : memref<16x4xf32, #tpu.memory_space<vmem>>, vector<16x4xf32>
      tpu.vector_store %arg8[%c0_16, %c0_17], %18 {strides = array<i32>} : memref<16x4xf32, #tpu.memory_space<vmem>>, vector<16x4xf32>,
    } else {
    }
    %c0 = arith.constant 0 : index
    %c0_1 = arith.constant 0 : index
    %3 = vector.load %arg2[%c0, %c0_1] : memref<16x32xf32, #tpu.memory_space<vmem>>, vector<16x32xf32>
    %c0_2 = arith.constant 0 : index
    %c0_3 = arith.constant 0 : index
    %4 = vector.load %arg3[%c0_2, %c0_3] : memref<32x32xf32, #tpu.memory_space<vmem>>, vector<32x32xf32>
    %cst = arith.constant dense<0.000000e+00> : vector<16x32xf32>
    %5 = tpu.matmul %3, %4, %cst {dimension_numbers = #tpu.dot_dimension_numbers<[1], [0], [0], [1], [0, 0, 1, 1], [], []>} : vector<16x32xf32>, vector<32x32xf32>, vector<16x32xf32> -> vector<16x32xf32>
    %c0_4 = arith.constant 0 : index
    %c0_5 = arith.constant 0 : index
    %6 = vector.load %arg4[%c0_4, %c0_5] : memref<1x32xf32, #tpu.memory_space<vmem>>, vector<1x32xf32>
    %7 = vector.broadcast %6 : vector<1x32xf32> to vector<16x32xf32>
    %8 = arith.addf %5, %7 : vector<16x32xf32>
    %9 = math.tanh %8 : vector<16x32xf32>
    %c0_6 = arith.constant 0 : index
    %c0_7 = arith.constant 0 : index
    %10 = vector.load %arg8[%c0_6, %c0_7] : memref<16x4xf32, #tpu.memory_space<vmem>>, vector<16x4xf32>
    %c0_8 = arith.constant 0 : index
    %c0_9 = arith.constant 0 : index
    %11 = vector.load %arg5[%c0_8, %c0_9] : memref<32x4xf32, #tpu.memory_space<vmem>>, vector<32x4xf32>
    %cst_10 = arith.constant dense<0.000000e+00> : vector<16x4xf32>
    %12 = tpu.matmul %9, %11, %cst_10 {dimension_numbers = #tpu.dot_dimension_numbers<[1], [0], [0], [1], [0, 0, 1, 1], [], []>} : vector<16x32xf32>, vector<32x4xf32>, vector<16x4xf32> -> vector<16x4xf32>
    %13 = arith.addf %10, %12 : vector<16x4xf32>
    %c0_11 = arith.constant 0 : index
    %c0_12 = arith.constant 0 : index
    %14 = vector.load %arg8[%c0_11, %c0_12] : memref<16x4xf32, #tpu.memory_space<vmem>>, vector<16x4xf32>
    tpu.vector_store %arg8[%c0_11, %c0_12], %13 {strides = array<i32>} : memref<16x4xf32, #tpu.memory_space<vmem>>, vector<16x4xf32>,
    %c0_i32_13 = arith.constant 0 : i32
    %15 = arith.cmpi eq, %arg1, %c0_i32_13 : i32
    %16 = arith.extui %15 : i1 to i32
    %c0_i32_14 = arith.constant 0 : i32
    %17 = arith.cmpi ne, %16, %c0_i32_14 : i32
    scf.if %17 {
      %c0_15 = arith.constant 0 : index
      %c0_16 = arith.constant 0 : index
      %18 = vector.load %arg8[%c0_15, %c0_16] : memref<16x4xf32, #tpu.memory_space<vmem>>, vector<16x4xf32>
      %c0_17 = arith.constant 0 : index
      %c0_18 = arith.constant 0 : index
      %19 = vector.load %arg6[%c0_17, %c0_18] : memref<1x4xf32, #tpu.memory_space<vmem>>, vector<1x4xf32>
      %20 = vector.broadcast %19 : vector<1x4xf32> to vector<16x4xf32>
      %21 = arith.addf %18, %20 : vector<16x4xf32>
      %c0_19 = arith.constant 0 : index
      %c0_20 = arith.constant 0 : index
      %22 = vector.load %arg7[%c0_19, %c0_20] : memref<16x4xf32, #tpu.memory_space<vmem>>, vector<16x4xf32>
      tpu.vector_store %arg7[%c0_19, %c0_20], %21 {strides = array<i32>} : memref<16x4xf32, #tpu.memory_space<vmem>>, vector<16x4xf32>,
    } else {
    }
    return
  }
  func.func @transform_0(%arg0: i32, %arg1: i32) -> (i32, i32) {
    %c0_i32 = arith.constant 0 : i32
    %c0_i32_0 = arith.constant 0 : i32
    return %arg0, %c0_i32 : i32, i32
  }
  func.func @transform_1(%arg0: i32, %arg1: i32) -> (i32, i32) {
    %c0_i32 = arith.constant 0 : i32
    %c0_i32_0 = arith.constant 0 : i32
    return %c0_i32, %arg1 : i32, i32
  }
  func.func @transform_2(%arg0: i32, %arg1: i32) -> (i32, i32) {
    %c0_i32 = arith.constant 0 : i32
    %c0_i32_0 = arith.constant 0 : i32
    return %c0_i32, %arg1 : i32, i32
  }
  func.func @transform_3(%arg0: i32, %arg1: i32) -> (i32, i32) {
    %c0_i32 = arith.constant 0 : i32
    %c0_i32_0 = arith.constant 0 : i32
    return %arg1, %c0_i32 : i32, i32
  }
  func.func @transform_4(%arg0: i32, %arg1: i32) -> (i32, i32) {
    %c0_i32 = arith.constant 0 : i32
    %c0_i32_0 = arith.constant 0 : i32
    %c0_i32_1 = arith.constant 0 : i32
    return %c0_i32, %c0_i32_0 : i32, i32
  }
  func.func @transform_5(%arg0: i32, %arg1: i32) -> (i32, i32) {
    %c0_i32 = arith.constant 0 : i32
    %c0_i32_0 = arith.constant 0 : i32
    return %arg0, %c0_i32 : i32, i32
  }
}

</mosaic_0001>

<llo_original>
// kernel: tpu_custom_call.1
$region0: #{tpu_custom_call.1}
  #allocation0 [shape = 'u32[]', space=smem, size = 0x4, offset = 0x4, fixed_abs, tag = 'smem constant byte address 0x4 - core index']
  #allocation1 [shape = 'u32[144,128]{1,0:T(1,128)}', space=vmem, size = 0x12000, scoped, tag = 'internal scratch']
  #allocation2 [shape = 'f32[16,4]{1,0:T(8,128)}', space=vmem, size = 0x2000, scoped, tag = 'scratch operand']
  %s0 = inlined_call_operand.hbm [shape: f32[16,32], index: 0, kind: input, shape index: {}]
  %s1 = inlined_call_operand.vmem [shape: f32[32,32], index: 1, kind: input, shape index: {}]
  %s2 = inlined_call_operand.vmem [shape: f32[1,32], index: 2, kind: input, shape index: {}]
  %s3 = inlined_call_operand.vmem [shape: f32[32,4], index: 3, kind: input, shape index: {}]
  %s4 = inlined_call_operand.vmem [shape: f32[1,4], index: 4, kind: input, shape index: {}]
  %s5 = inlined_call_operand.vmem [shape: f32[16,4], index: 5, kind: output, shape index: {}]
  %s6 = sld [smem:[#allocation0]]
  $region42: #{tpu_custom_call.1} parent=0
    _
  %s8 = ssub.s32 1, %s6
  %s9 = scalar_select 0, %s8, %s6
  $region1: #{tpu_custom_call.1} parent=0
    #allocation3 [shape = 'u8[8192]{0}', space=vmem, size = 0x2000, scoped, tag = 'input window, operand 0, single buffered']
    #allocation4 [shape = 's32[1]{0}', space=sflag, size = 0x4, scoped, tag = 'scoped memory for tpu_custom_call.1']
    %10 = vsyncpa [#allocation4], 0
    // Predicated region
    $region2: #{tpu_custom_call.1} parent=1 // pred_check
      _
    $region3: #{tpu_custom_call.1} parent=1 // pred_check_branch
      %12 = sbr.rel (0) target = $region5
    $region4: #{tpu_custom_call.1} parent=1 // pred_region
      %s14 = ssub.s32 256, 256
      %15 = vsyncadd [#allocation4], %s14
      %s16 = sshll.u32 [#allocation3], 4
      %s17 = int_to_ptr.vmem [resolvable:$true] %s16
      %22 = dma.hbm_to_vmem [thread:$0]  %s0, 256, %s17, [#allocation4], 128, 128, 8
    $region5: #{tpu_custom_call.1} parent=1 // pred_fallthru
      _
    // Predicated region
    $region6: #{tpu_custom_call.1} parent=1 // pred_check
      _
    $region7: #{tpu_custom_call.1} parent=1 // pred_check_branch
      %24 = sbr.rel (0) target = $region9
    $region8: #{tpu_custom_call.1} parent=1 // pred_region
      _
    $region9: #{tpu_custom_call.1} parent=1 // pred_fallthru
      _
    // Predicated region
    $region10: #{tpu_custom_call.1} parent=1 // pred_check
      _
    $region11: #{tpu_custom_call.1} parent=1 // pred_check_branch
      %26 = sbr.rel (0) target = $region13
    $region12: #{tpu_custom_call.1} parent=1 // pred_region
      _
    $region13: #{tpu_custom_call.1} parent=1 // pred_fallthru
      _
    // Predicated region
    $region14: #{tpu_custom_call.1} parent=1 // pred_check
      _
    $region15: #{tpu_custom_call.1} parent=1 // pred_check_branch
      %28 = sbr.rel (0) target = $region17
    $region16: #{tpu_custom_call.1} parent=1 // pred_region
      _
    $region17: #{tpu_custom_call.1} parent=1 // pred_fallthru
      _
    // Predicated region
    $region18: #{tpu_custom_call.1} parent=1 // pred_check
      _
    $region19: #{tpu_custom_call.1} parent=1 // pred_check_branch
      %30 = sbr.rel (0) target = $region21
    $region20: #{tpu_custom_call.1} parent=1 // pred_region
      _
    $region21: #{tpu_custom_call.1} parent=1 // pred_fallthru
      _
    // Predicated region
    $region22: #{tpu_custom_call.1} parent=1 // pred_check
      _
    $region23: #{tpu_custom_call.1} parent=1 // pred_check_branch
      %32 = sbr.rel (0) target = $region25
    $region24: #{tpu_custom_call.1} parent=1 // pred_region
      %33 = dma.done [#allocation4], 256
    $region25: #{tpu_custom_call.1} parent=1 // pred_fallthru
      _
    %p34 = scmp.eq.s32.totalorder 0, 0
    // Predicated region
    $region26: #{tpu_custom_call.1} parent=1 // pred_check
      %p35 = pneg %p34
    $region27: #{tpu_custom_call.1} parent=1 // pred_check_branch
      %37 = sbr.rel (%p35) target = $region29
    $region28: #{tpu_custom_call.1} parent=1 // pred_region
      %vm38 = vcmask 31744
      %39 = vst.msk [vmem:[#allocation2] sm:$0xff] %vm38, 0.0
      %40 = vst.msk [vmem:[#allocation2 + $0x8] sm:$0xff] %vm38, 0.0
    $region29: #{tpu_custom_call.1} parent=1 // pred_fallthru
      _
    %v41 = vld [vmem:[#allocation3] sm:$0xff]
    %v42 = vld [vmem:[#allocation3 + $0x8] sm:$0xff]
    %v43 = vld [vmem:[%s1] sm:$0xff]
    %v44 = vld [vmem:[%s1 + $0x8] sm:$0xff]
    %v45 = vld [vmem:[%s1 + $0x10] sm:$0xff]
    %v46 = vld [vmem:[%s1 + $0x18] sm:$0xff]
    %v47 = vld [vmem:[%s2] sm:$0x1]
    %v49 = vlaneseq
    %v50 = vshrl.u32 %v49, 7
    %v51 = vsub.s32 0, %v50
    %v52 = vrot.slane %v47, %v51
    %vm54 = vcmask 261120
    %v56 = vsel %vm54, %v41, 0
    %v59 = vsel %vm54, %v42, 0
    %61 = vmatprep.subr.mxu0 0.0
    %62 = vmatpush1.msra.mxu0 %v43
    %63 = vmatprep.subr.mxu0 0.0
    %64 = vmatpush1.msra.mxu0 %v44
    %65 = vmatprep.subr.mxu0 0.0
    %66 = vmatpush1.msra.mxu0 %v45
    %67 = vmatprep.subr.mxu0 0.0
    %68 = vmatpush1.msra.mxu0 %v46
    %69 = vmatprep.subr.mxu0 0.0
    %70 = vmatpush1.msra.mxu0 0.0
    %71 = vmatprep.subr.mxu0 0.0
    %72 = vmatpush1.msra.mxu0 0.0
    %73 = vmatprep.subr.mxu0 0.0
    %74 = vmatpush1.msra.mxu0 0.0
    %75 = vmatprep.subr.mxu0 0.0
    %76 = vmatpush1.msra.mxu0 0.0
    %77 = vmatprep.subr.mxu0 0.0
    %78 = vmatpush1.msra.mxu0 0.0
    %79 = vmatprep.subr.mxu0 0.0
    %80 = vmatpush1.msra.mxu0 0.0
    %81 = vmatprep.subr.mxu0 0.0
    %82 = vmatpush1.msra.mxu0 0.0
    %83 = vmatprep.subr.mxu0 0.0
    %84 = vmatpush1.msra.mxu0 0.0
    %85 = vmatprep.subr.mxu0 0.0
    %86 = vmatpush1.msra.mxu0 0.0
    %87 = vmatprep.subr.mxu0 0.0
    %88 = vmatpush1.msra.mxu0 0.0
    %89 = vmatprep.subr.mxu0 0.0
    %90 = vmatpush1.msra.mxu0 0.0
    %91 = vmatprep.subr.mxu0 0.0
    %92 = vmatpush1.msra.mxu0 0.0
    %93 = vmatprep.subr.mxu0 0.0
    %94 = vmatpush1.msra.mxu0 0.0
    %95 = vmatprep.subr.mxu0 0.0
    %96 = vmatpush1.msra.mxu0 0.0
    %97 = vmatprep.subr.mxu0 0.0
    %98 = vmatpush1.msra.mxu0 0.0
    %99 = vmatprep.subr.mxu0 0.0
    %100 = vmatpush1.msra.mxu0 0.0
    %101 = vmatprep.subr.mxu0 0.0
    %102 = vmatpush1.msra.mxu0 0.0
    %103 = vmatprep.subr.mxu0 0.0
    %104 = vmatpush1.msra.mxu0 0.0
    %105 = vmatprep.subr.mxu0 0.0
    %106 = vmatpush1.msra.mxu0 0.0
    %107 = vmatprep.subr.mxu0 0.0
    %108 = vmatpush1.msra.mxu0 0.0
    %109 = vmatprep.subr.mxu0 0.0
    %110 = vmatpush1.msra.mxu0 0.0
    %111 = vmatprep.subr.mxu0 0.0
    %112 = vmatpush1.msra.mxu0 0.0
    %113 = vmatprep.subr.mxu0 0.0
    %114 = vmatpush1.msra.mxu0 0.0
    %115 = vmatprep.subr.mxu0 0.0
    %116 = vmatpush1.msra.mxu0 0.0
    %117 = vmatprep.subr.mxu0 0.0
    %118 = vmatpush1.msra.mxu0 0.0
    %119 = vmatprep.subr.mxu0 0.0
    %120 = vmatpush1.msra.mxu0 0.0
    %121 = vmatprep.subr.mxu0 0.0
    %122 = vmatpush1.msra.mxu0 0.0
    %123 = vmatprep.subr.mxu0 0.0
    %124 = vmatpush1.msra.mxu0 0.0
    %125 = vmatprep.mubr.f32.mxu0 0.0
    %126 = vmatmul.mubr.f32.gmra.mrb[0].mxu0 %v56
    %v127 = vpop.f32.mrb[0].mxu0
    %v128 = vadd.f32 %v52, %v127
    %v129 = vpop.f32.mrb[0].mxu0
    %130 = vmatprep.mubr.f32.mxu0 0.0
    %131 = vmatmul.mubr.f32.gmra.mrb[0].mxu0 %v59
    %v132 = vpop.f32.mrb[0].mxu0
    %v133 = vadd.f32 %v52, %v132
    %v134 = vpop.f32.mrb[0].mxu0
    %135 = vdwg.mxu0
    %v136 = vtanh.pop %v128
    %v137 = vtanh.pop %v133
    %v138 = vld [vmem:[#allocation2] sm:$0xff]
    %v139 = vld [vmem:[#allocation2 + $0x8] sm:$0xff]
    %v140 = vld [vmem:[%s3] sm:$0xff]
    %v141 = vld [vmem:[%s3 + $0x8] sm:$0xff]
    %v142 = vld [vmem:[%s3 + $0x10] sm:$0xff]
    %v143 = vld [vmem:[%s3 + $0x18] sm:$0xff]
    %v145 = vsel %vm54, %v136, 0
    %v148 = vsel %vm54, %v137, 0
    %150 = vmatprep.subr.mxu0 0.0
    %151 = vmatpush1.msra.mxu0 %v140
    %152 = vmatprep.subr.mxu0 0.0
    %153 = vmatpush1.msra.mxu0 %v141
    %154 = vmatprep.subr.mxu0 0.0
    %155 = vmatpush1.msra.mxu0 %v142
    %156 = vmatprep.subr.mxu0 0.0
    %157 = vmatpush1.msra.mxu0 %v143
    %158 = vmatprep.subr.mxu0 0.0
    %159 = vmatpush1.msra.mxu0 0.0
    %160 = vmatprep.subr.mxu0 0.0
    %161 = vmatpush1.msra.mxu0 0.0
    %162 = vmatprep.subr.mxu0 0.0
    %163 = vmatpush1.msra.mxu0 0.0
    %164 = vmatprep.subr.mxu0 0.0
    %165 = vmatpush1.msra.mxu0 0.0
    %166 = vmatprep.subr.mxu0 0.0
    %167 = vmatpush1.msra.mxu0 0.0
    %168 = vmatprep.subr.mxu0 0.0
    %169 = vmatpush1.msra.mxu0 0.0
    %170 = vmatprep.subr.mxu0 0.0
    %171 = vmatpush1.msra.mxu0 0.0
    %172 = vmatprep.subr.mxu0 0.0
    %173 = vmatpush1.msra.mxu0 0.0
    %174 = vmatprep.subr.mxu0 0.0
    %175 = vmatpush1.msra.mxu0 0.0
    %176 = vmatprep.subr.mxu0 0.0
    %177 = vmatpush1.msra.mxu0 0.0
    %178 = vmatprep.subr.mxu0 0.0
    %179 = vmatpush1.msra.mxu0 0.0
    %180 = vmatprep.subr.mxu0 0.0
    %181 = vmatpush1.msra.mxu0 0.0
    %182 = vmatprep.subr.mxu0 0.0
    %183 = vmatpush1.msra.mxu0 0.0
    %184 = vmatprep.subr.mxu0 0.0
    %185 = vmatpush1.msra.mxu0 0.0
    %186 = vmatprep.subr.mxu0 0.0
    %187 = vmatpush1.msra.mxu0 0.0
    %188 = vmatprep.subr.mxu0 0.0
    %189 = vmatpush1.msra.mxu0 0.0
    %190 = vmatprep.subr.mxu0 0.0
    %191 = vmatpush1.msra.mxu0 0.0
    %192 = vmatprep.subr.mxu0 0.0
    %193 = vmatpush1.msra.mxu0 0.0
    %194 = vmatprep.subr.mxu0 0.0
    %195 = vmatpush1.msra.mxu0 0.0
    %196 = vmatprep.subr.mxu0 0.0
    %197 = vmatpush1.msra.mxu0 0.0
    %198 = vmatprep.subr.mxu0 0.0
    %199 = vmatpush1.msra.mxu0 0.0
    %200 = vmatprep.subr.mxu0 0.0
    %201 = vmatpush1.msra.mxu0 0.0
    %202 = vmatprep.subr.mxu0 0.0
    %203 = vmatpush1.msra.mxu0 0.0
    %204 = vmatprep.subr.mxu0 0.0
    %205 = vmatpush1.msra.mxu0 0.0
    %206 = vmatprep.subr.mxu0 0.0
    %207 = vmatpush1.msra.mxu0 0.0
    %208 = vmatprep.subr.mxu0 0.0
    %209 = vmatpush1.msra.mxu0 0.0
    %210 = vmatprep.subr.mxu0 0.0
    %211 = vmatpush1.msra.mxu0 0.0
    %212 = vmatprep.subr.mxu0 0.0
    %213 = vmatpush1.msra.mxu0 0.0
    %214 = vmatprep.mubr.f32.mxu0 0.0
    %215 = vmatmul.mubr.f32.gmra.mrb[0].mxu0 %v145
    %v216 = vpop.f32.mrb[0].mxu0
    %v217 = vadd.f32 0.0, %v216
    %v218 = vpop.f32.mrb[0].mxu0
    %219 = vmatprep.mubr.f32.mxu0 0.0
    %220 = vmatmul.mubr.f32.gmra.mrb[0].mxu0 %v148
    %v221 = vpop.f32.mrb[0].mxu0
    %v222 = vadd.f32 0.0, %v221
    %v223 = vpop.f32.mrb[0].mxu0
    %224 = vdwg.mxu0
    %v225 = vadd.f32 %v138, %v217
    %v226 = vadd.f32 %v139, %v222
    %vm227 = vcmask 31744
    %228 = vst.msk [vmem:[#allocation2] sm:$0xff] %vm227, %v225
    %229 = vst.msk [vmem:[#allocation2 + $0x8] sm:$0xff] %vm227, %v226
    // Predicated region
    $region30: #{tpu_custom_call.1} parent=1 // pred_check
      %p230 = pneg %p34
    $region31: #{tpu_custom_call.1} parent=1 // pred_check_branch
      %232 = sbr.rel (%p230) target = $region33
    $region32: #{tpu_custom_call.1} parent=1 // pred_region
      %v233 = vld [vmem:[#allocation2] sm:$0xff]
      %v234 = vld [vmem:[#allocation2 + $0x8] sm:$0xff]
      %v235 = vld [vmem:[%s4] sm:$0x1]
      %v237 = vlaneseq
      %v238 = vshrl.u32 %v237, 7
      %v239 = vsub.s32 0, %v238
      %v240 = vrot.slane %v235, %v239
      %v242 = vadd.f32 %v233, %v240
      %v243 = vadd.f32 %v234, %v240
      %244 = vst.msk [vmem:[%s5] sm:$0xff] %vm227, %v242
      %245 = vst.msk [vmem:[%s5 + $0x8] sm:$0xff] %vm227, %v243
    $region33: #{tpu_custom_call.1} parent=1 // pred_fallthru
      _
    // Predicated region
    $region34: #{tpu_custom_call.1} parent=1 // pred_check
      _
    $region35: #{tpu_custom_call.1} parent=1 // pred_check_branch
      %247 = sbr.rel (0) target = $region37
    $region36: #{tpu_custom_call.1} parent=1 // pred_region
      _
    $region37: #{tpu_custom_call.1} parent=1 // pred_fallthru
      _
    // Predicated region
    $region38: #{tpu_custom_call.1} parent=1 // pred_check
      _
    $region39: #{tpu_custom_call.1} parent=1 // pred_check_branch
      %249 = sbr.rel (0) target = $region41
    $region40: #{tpu_custom_call.1} parent=1 // pred_region
      _
    $region41: #{tpu_custom_call.1} parent=1 // pred_fallthru
      _
    %250 = vsyncpa [#allocation4], 1

</llo_original>
